<compile_context>
chip_gen: v5e
topology: v5e:2x2
jax: 0.10.0
libtpu: 0.0.40
codegen_flags: <defaults>
</compile_context>

<pallas_src>
import functools

import jax
import jax.numpy as jnp
from jax import lax
from jax.experimental import pallas as pl
from jax.experimental.pallas import tpu as pltpu


_LANE = 128     # lane width (last-dim granularity)
_SUBLANE = 8    # f32 sublane packing (second-to-last dim granularity)


def _round_up(x, m):
    return ((x + m - 1) // m) * m


def _vmem_budget_bytes():
    """~70% of physical VMEM (headroom for Mosaic scratch / spills)."""
    cap = 64 << 20  # conservative fallback = v7x physical VMEM per TC
    try:
        info = pltpu.get_tpu_info()
        cap = int(getattr(info, "vmem_capacity_bytes", cap))
    except Exception:
        pass
    return int(cap * 0.7)


def _pick_tile(dim, granularity, cap, waste_frac=0.0625):
    """Largest tile (multiple of `granularity`, <= cap) whose padding waste on
    `dim` is at most waste_frac * dim.  waste_frac=0 -> exact divisors only."""
    dim = _round_up(dim, granularity)
    cap = max(granularity, min(cap, dim))
    max_waste = int(dim * waste_frac)
    best = granularity
    t = granularity
    while t <= cap:
        if _round_up(dim, t) - dim <= max_waste:
            best = t
        t += granularity
    return best


def _tile_vmem_bytes(tm, tn, tk, in_isz, out_isz):
    return (2 * tm * tk * in_isz        # x tiles (double-buffered)
            + 2 * tk * tn * in_isz      # weight tiles (double-buffered)
            + 2 * tm * tn * out_isz     # output tiles (double-buffered)
            + tm * tn * 4               # f32 accumulator scratch
            + 2 * 2 * tn * 4)           # bias tiles


# ---------------------------------------------------------------------------
# Kernels
# ---------------------------------------------------------------------------
def _dense_small_kernel(x_ref, w_ref, b_ref, o_ref):
    # y = x @ W^T + b with W kept in its native (N, K) layout.  Contraction is
    # over the last (lane) dim of both operands — the flash-attention q @ k^T
    # pattern, which lowers to a native MXU transposed matmul (no XLU transpose).
    acc = lax.dot_general(
        x_ref[...], w_ref[...],
        dimension_numbers=(((1,), (1,)), ((), ())),
        preferred_element_type=jnp.float32,
    )
    o_ref[...] = (acc + b_ref[...]).astype(o_ref.dtype)


def _dense_tiled_kernel(x_ref, w_ref, b_ref, o_ref, acc_ref):
    k = pl.program_id(2)

    @pl.when(k == 0)
    def _init():
        # Seed the accumulator with the broadcast bias: saves a full (tm, tn)
        # VPU add on the finalize step.
        acc_ref[...] = jnp.broadcast_to(
            b_ref[...].astype(jnp.float32), acc_ref.shape)

    acc_ref[...] += lax.dot_general(
        x_ref[...], w_ref[...],
        dimension_numbers=(((1,), (1,)), ((), ())),
        preferred_element_type=jnp.float32,
    )

    @pl.when(k == pl.num_programs(2) - 1)
    def _finalize():
        o_ref[...] = acc_ref[...].astype(o_ref.dtype)


# ---------------------------------------------------------------------------
# Wrapper
# ---------------------------------------------------------------------------
def _dense_2d(x2d, weight, bias, out_dtype, force_tiled, compute_dtype):
    """x2d: (B, K), weight: (N, K), bias: (N,) -> (B, N) in out_dtype."""
    B, K = x2d.shape
    N = weight.shape[0]

    cdtype = jnp.dtype(compute_dtype) if compute_dtype is not None else x2d.dtype
    if x2d.dtype != cdtype:
        x2d = x2d.astype(cdtype)
    if weight.dtype != cdtype:
        weight = weight.astype(cdtype)
    bias32 = bias.astype(jnp.float32).reshape(1, N)

    in_isz = jnp.dtype(cdtype).itemsize
    out_isz = jnp.dtype(out_dtype).itemsize

    vmem_budget = _vmem_budget_bytes()
    small_cap = min(vmem_budget // 3, 16 << 20)
    small_bytes = in_isz * (B * K + N * K) + out_isz * B * N + 4 * N

    if (not force_tiled) and small_bytes <= small_cap:
        # ---- single-block fast path: no grid, no padding, no output slice ----
        cost = pl.CostEstimate(flops=2 * B * K * N, transcendentals=0,
                               bytes_accessed=small_bytes)
        return pl.pallas_call(
            _dense_small_kernel,
            out_shape=jax.ShapeDtypeStruct((B, N), out_dtype),
            in_specs=[pl.BlockSpec(memory_space=pltpu.MemorySpace.VMEM)] * 3,
            out_specs=pl.BlockSpec(memory_space=pltpu.MemorySpace.VMEM),
            compiler_params=pltpu.CompilerParams(vmem_limit_bytes=vmem_budget),
            cost_estimate=cost,
        )(x2d, weight, bias32)

    # ---- tiled, software-pipelined path ----
    Bp = _round_up(B, _SUBLANE)
    Kp = _round_up(K, _LANE)
    Np = _round_up(N, _LANE)

    tm = _pick_tile(Bp, _SUBLANE, 512)
    Bp = _round_up(Bp, tm)
    tn = _pick_tile(Np, _LANE, 1024)
    Np = _round_up(Np, tn)
    # v7x has two TensorCores; only "parallel" grid axes shard across them.
    # Keep >= 2 blocks on a parallel axis when the batch axis collapses to one.
    if Bp // tm < 2 and Np // tn < 2 and Np >= 2 * _LANE:
        tn = _pick_tile(Np, _LANE, Np // 2, waste_frac=0.0)

    tk_cap = 1024
    while tk_cap > _LANE and (_tile_vmem_bytes(tm, tn, tk_cap, in_isz, out_isz)
                              > vmem_budget - (2 << 20)):
        tk_cap -= _LANE
    tk = _pick_tile(Kp, _LANE, tk_cap)
    Kp = _round_up(Kp, tk)

    if (Bp, Kp) != (B, K):
        x2d = jnp.pad(x2d, ((0, Bp - B), (0, Kp - K)))
    if (Np, Kp) != (N, K):
        weight = jnp.pad(weight, ((0, Np - N), (0, Kp - K)))
    if Np != N:
        bias32 = jnp.pad(bias32, ((0, 0), (0, Np - N)))

    grid = (Bp // tm, Np // tn, Kp // tk)

    # x is re-read once per N block, W once per M block (advisory only).
    cost = pl.CostEstimate(
        flops=2 * Bp * Kp * Np,
        transcendentals=0,
        bytes_accessed=(in_isz * Bp * Kp * grid[1]
                        + in_isz * Np * Kp * grid[0]
                        + 4 * Np
                        + out_isz * Bp * Np),
    )
    vmem_limit = min(_tile_vmem_bytes(tm, tn, tk, in_isz, out_isz) + (2 << 20),
                     vmem_budget)

    yp = pl.pallas_call(
        _dense_tiled_kernel,
        out_shape=jax.ShapeDtypeStruct((Bp, Np), out_dtype),
        grid_spec=pltpu.PrefetchScalarGridSpec(
            num_scalar_prefetch=0,
            grid=grid,
            in_specs=[
                pl.BlockSpec((tm, tk), lambda i, j, k: (i, k)),
                pl.BlockSpec((tn, tk), lambda i, j, k: (j, k)),
                pl.BlockSpec((1, tn), lambda i, j, k: (0, j)),
            ],
            out_specs=pl.BlockSpec((tm, tn), lambda i, j, k: (i, j)),
            scratch_shapes=[pltpu.VMEM((tm, tn), jnp.float32)],
        ),
        compiler_params=pltpu.CompilerParams(
            dimension_semantics=("parallel", "parallel", "arbitrary"),
            vmem_limit_bytes=vmem_limit,
        ),
        cost_estimate=cost,
    )(x2d, weight, bias32)

    if (Bp, Np) != (B, N):
        yp = yp[:B, :N]
    return yp


@functools.partial(jax.jit,
                   static_argnames=("one_d", "force_tiled", "compute_dtype"))
def dense_forward(x, weight, bias, one_d, force_tiled=False, compute_dtype=None):
    """Pallas equivalent of Dense.forward.

    x:      (..., input_dim)
    weight: (output_dim, input_dim)   -- PyTorch nn.Linear convention
    bias:   (output_dim,)
    one_d:  True  -> (..., output_dim, 1)
            False -> (..., output_dim, 1, 1)
    """
    input_dim = x.shape[-1]
    output_dim = weight.shape[0]
    lead = x.shape[:-1]

    x2d = x.reshape(-1, input_dim)
    y2d = _dense_2d(x2d, weight, bias, x.dtype, force_tiled, compute_dtype)
    y = y2d.reshape(*lead, output_dim)

    if one_d:
        return y[..., None]            # (..., output_dim, 1)
    return y[..., None, None]          # (..., output_dim, 1, 1)


def _ref_forward(x, weight, bias, one_d):
    y = jnp.einsum("...i,oi->...o", x, weight,
                   precision=jax.lax.Precision.HIGHEST) + bias
    return y[..., None] if one_d else y[..., None, None]


if __name__ == "__main__":
    key = jax.random.PRNGKey(0)
    k_x, k_w, k_b, k_x2, k_w2, k_b2 = jax.random.split(key, 6)

    # ---- CFGAN-like tiny shapes: single-block (grid-less) fast path ----
    batch, input_dim, output_dim = 8, 32, 64
    x = jax.random.normal(k_x, (batch, input_dim), dtype=jnp.float32)
    bound = 1.0 / (input_dim ** 0.5)
    weight = jax.random.uniform(k_w, (output_dim, input_dim), dtype=jnp.float32,
                                minval=-bound, maxval=bound)
    bias = jax.random.uniform(k_b, (output_dim,), dtype=jnp.float32,
                              minval=-bound, maxval=bound)

    out_2d = dense_forward(x, weight, bias, one_d=False)
    jax.block_until_ready(out_2d)
    ref_2d = _ref_forward(x, weight, bias, one_d=False)
    assert out_2d.shape == (batch, output_dim, 1, 1), out_2d.shape
    assert jnp.allclose(out_2d, ref_2d, atol=1e-5, rtol=1e-5)

    out_1d = dense_forward(x, weight, bias, one_d=True)
    jax.block_until_ready(out_1d)
    ref_1d = _ref_forward(x, weight, bias, one_d=True)
    assert out_1d.shape == (batch, output_dim, 1), out_1d.shape
    assert jnp.allclose(out_1d, ref_1d, atol=1e-5, rtol=1e-5)

    # ---- Tiled path: multi-step K reduction, bias seeded at k==0, >=2 N blocks,
    #      tiles are divisors of the (8,128)-padded dims (no over-padding) ----
    B2, K2, N2 = 32, 1152, 256
    x2 = jax.random.normal(k_x2, (B2, K2), dtype=jnp.float32)
    bound2 = 1.0 / (K2 ** 0.5)
    w2 = jax.random.uniform(k_w2, (N2, K2), dtype=jnp.float32,
                            minval=-bound2, maxval=bound2)
    b2 = jax.random.uniform(k_b2, (N2,), dtype=jnp.float32,
                            minval=-bound2, maxval=bound2)

    out_t = dense_forward(x2, w2, b2, one_d=True, force_tiled=True)
    jax.block_until_ready(out_t)
    ref_t = _ref_forward(x2, w2, b2, one_d=True)
    assert out_t.shape == (B2, N2, 1), out_t.shape
    # MXU f32 dot at default precision over K=1152 needs a loose-ish tolerance.
    assert jnp.allclose(out_t, ref_t, atol=2e-3, rtol=2e-3)

    # ---- Optional bf16 compute path (opt-in; accumulation / bias stay f32) ----
    out_bf = dense_forward(x2, w2, b2, one_d=False, force_tiled=True,
                           compute_dtype=jnp.bfloat16)
    jax.block_until_ready(out_bf)
    ref_bf = _ref_forward(x2, w2, b2, one_d=False)
    assert out_bf.shape == (B2, N2, 1, 1), out_bf.shape
    assert jnp.allclose(out_bf, ref_bf, atol=3e-2, rtol=3e-2)

    print("KERNEL_OK")
</pallas_src>

<mosaic_0001>
module attributes {stable_mosaic.version = 11 : i64} {
  func.func @_dense_small_kernel(%arg0: memref<8x32xf32, #tpu.memory_space<vmem>>, %arg1: memref<64x32xf32, #tpu.memory_space<vmem>>, %arg2: memref<1x64xf32, #tpu.memory_space<vmem>>, %arg3: memref<8x64xf32, #tpu.memory_space<vmem>>) attributes {dimension_semantics = [], scalar_prefetch = 0 : i64, scratch_operands = 0 : i64, tpu.core_type = #tpu.core_type<tc>} {
    %c0 = arith.constant 0 : index
    %c0_0 = arith.constant 0 : index
    %0 = vector.load %arg0[%c0, %c0_0] : memref<8x32xf32, #tpu.memory_space<vmem>>, vector<8x32xf32>
    %c0_1 = arith.constant 0 : index
    %c0_2 = arith.constant 0 : index
    %1 = vector.load %arg1[%c0_1, %c0_2] : memref<64x32xf32, #tpu.memory_space<vmem>>, vector<64x32xf32>
    %cst = arith.constant dense<0.000000e+00> : vector<8x64xf32>
    %2 = tpu.matmul %0, %1, %cst {dimension_numbers = #tpu.dot_dimension_numbers<[1], [1], [0], [0], [0, 0, 1, 0], [], []>} : vector<8x32xf32>, vector<64x32xf32>, vector<8x64xf32> -> vector<8x64xf32>
    %c0_3 = arith.constant 0 : index
    %c0_4 = arith.constant 0 : index
    %3 = vector.load %arg2[%c0_3, %c0_4] : memref<1x64xf32, #tpu.memory_space<vmem>>, vector<1x64xf32>
    %4 = vector.broadcast %3 : vector<1x64xf32> to vector<8x64xf32>
    %5 = arith.addf %2, %4 : vector<8x64xf32>
    %c0_5 = arith.constant 0 : index
    %c0_6 = arith.constant 0 : index
    %6 = vector.load %arg3[%c0_5, %c0_6] : memref<8x64xf32, #tpu.memory_space<vmem>>, vector<8x64xf32>
    tpu.vector_store %arg3[%c0_5, %c0_6], %5 {strides = array<i32>} : memref<8x64xf32, #tpu.memory_space<vmem>>, vector<8x64xf32>,
    return
  }
}

</mosaic_0001>

<llo_original>
// kernel: dense_forward.1
$region0: #{dense_forward.1}
  #allocation0 [shape = 'u32[]', space=smem, size = 0x4, offset = 0x4, fixed_abs, tag = 'smem constant byte address 0x4 - core index']
  #allocation1 [shape = 'u32[72,128]{1,0:T(1,128)}', space=vmem, size = 0x9000, scoped, tag = 'internal scratch']
  %s0 = inlined_call_operand.vmem [shape: f32[8,32], index: 0, kind: input, shape index: {}]
  %s1 = inlined_call_operand.vmem [shape: f32[64,32], index: 1, kind: input, shape index: {}]
  %s2 = inlined_call_operand.vmem [shape: f32[1,64], index: 2, kind: input, shape index: {}]
  %s3 = inlined_call_operand.hbm [shape: f32[8,64], index: 3, kind: output, shape index: {}]
  %s4 = sld [smem:[#allocation0]]
  $region22: #{dense_forward.1} parent=0
    _
  %s6 = ssub.s32 1, %s4
  %s7 = scalar_select 0, %s6, %s4
  $region1: #{dense_forward.1} parent=0
    #allocation2 [shape = 'u8[4096]{0}', space=vmem, size = 0x1000, scoped, tag = 'output window, operand 0, single buffered']
    #allocation3 [shape = 's32[1]{0}', space=sflag, size = 0x4, scoped, tag = 'scoped memory for dense_forward.1']
    %8 = vsyncpa [#allocation3], 0
    // Predicated region
    $region2: #{dense_forward.1} parent=1 // pred_check
      _
    $region3: #{dense_forward.1} parent=1 // pred_check_branch
      %10 = sbr.rel (0) target = $region5
    $region4: #{dense_forward.1} parent=1 // pred_region
      _
    $region5: #{dense_forward.1} parent=1 // pred_fallthru
      _
    // Predicated region
    $region6: #{dense_forward.1} parent=1 // pred_check
      _
    $region7: #{dense_forward.1} parent=1 // pred_check_branch
      %12 = sbr.rel (0) target = $region9
    $region8: #{dense_forward.1} parent=1 // pred_region
      _
    $region9: #{dense_forward.1} parent=1 // pred_fallthru
      _
    // Predicated region
    $region10: #{dense_forward.1} parent=1 // pred_check
      _
    $region11: #{dense_forward.1} parent=1 // pred_check_branch
      %14 = sbr.rel (0) target = $region13
    $region12: #{dense_forward.1} parent=1 // pred_region
      _
    $region13: #{dense_forward.1} parent=1 // pred_fallthru
      _
    %v15 = vld [vmem:[%s0] sm:$0xff]
    %v16 = vld [vmem:[%s1] sm:$0xff]
    %v17 = vld [vmem:[%s1 + $0x8] sm:$0xff]
    %v18 = vld [vmem:[%s1 + $0x10] sm:$0xff]
    %v19 = vld [vmem:[%s1 + $0x18] sm:$0xff]
    %v20 = vld [vmem:[%s1 + $0x20] sm:$0xff]
    %v21 = vld [vmem:[%s1 + $0x28] sm:$0xff]
    %v22 = vld [vmem:[%s1 + $0x30] sm:$0xff]
    %v23 = vld [vmem:[%s1 + $0x38] sm:$0xff]
    %v24 = vld [vmem:[%s2] sm:$0x1]
    %v26 = vperm.slane %v24, 0
    %vm28 = vcmask 261120
    %v30 = vsel %vm28, %v15, 0
    %v33 = vsel %vm28, %v16, 0
    %v36 = vsel %vm28, %v17, 0
    %v39 = vsel %vm28, %v18, 0
    %v42 = vsel %vm28, %v19, 0
    %v45 = vsel %vm28, %v20, 0
    %v48 = vsel %vm28, %v21, 0
    %v51 = vsel %vm28, %v22, 0
    %v54 = vsel %vm28, %v23, 0
    %56 = vmatpush.xpose.msra.mxu0 0.0
    %57 = vmatpush.xpose.msra.mxu0 0.0
    %58 = vmatpush.xpose.msra.mxu0 0.0
    %59 = vmatpush.xpose.msra.mxu0 0.0
    %60 = vmatpush.xpose.msra.mxu0 0.0
    %61 = vmatpush.xpose.msra.mxu0 0.0
    %62 = vmatpush.xpose.msra.mxu0 0.0
    %63 = vmatpush.xpose.msra.mxu0 0.0
    %64 = vmatpush.xpose.msra.mxu0 %v54
    %65 = vmatpush.xpose.msra.mxu0 %v51
    %66 = vmatpush.xpose.msra.mxu0 %v48
    %67 = vmatpush.xpose.msra.mxu0 %v45
    %68 = vmatpush.xpose.msra.mxu0 %v42
    %69 = vmatpush.xpose.msra.mxu0 %v39
    %70 = vmatpush.xpose.msra.mxu0 %v36
    %71 = vmatpush.xpose.msra.mxu0 %v33
    %72 = vmatmul.f32.gmra.mxu0 %v30
    %v73 = vpop.f32.mrf.mxu0
    %v74 = vadd.f32 %v26, %v73
    %75 = vdwg.mxu0
    %vm76 = vcmask 523264
    %77 = vst.msk [vmem:[#allocation2] sm:$0xff] %vm76, %v74
    // Predicated region
    $region14: #{dense_forward.1} parent=1 // pred_check
      _
    $region15: #{dense_forward.1} parent=1 // pred_check_branch
      %79 = sbr.rel (0) target = $region17
    $region16: #{dense_forward.1} parent=1 // pred_region
      %81 = vsyncadd [#allocation3], 0
      %s83 = sshll.u32 [#allocation2], 4
      %s84 = int_to_ptr.vmem [resolvable:$true] %s83
      %s85 = sshll.u32 %s3, 4
      %s86 = int_to_ptr.hbm [resolvable:$true] %s85
      %88 = dma.vmem_to_hbm [thread:$0]  %s84, 128, %s86, [#allocation3]
    $region17: #{dense_forward.1} parent=1 // pred_fallthru
      _
    // Predicated region
    $region18: #{dense_forward.1} parent=1 // pred_check
      _
    $region19: #{dense_forward.1} parent=1 // pred_check_branch
      %90 = sbr.rel (0) target = $region21
    $region20: #{dense_forward.1} parent=1 // pred_region
      %92 = dma.done [#allocation3], 128
    $region21: #{dense_forward.1} parent=1 // pred_fallthru
      _
    %93 = vsyncpa [#allocation3], 1

</llo_original>
